<compile_context>
chip_gen: v5e
topology: v5e:2x2
jax: 0.10.0
libtpu: 0.0.40
codegen_flags: <defaults>
</compile_context>

<pallas_src>
import functools

import jax
import jax.numpy as jnp
from jax.experimental import pallas as pl
from jax.experimental.pallas import tpu as pltpu


# ----------------------------------------------------------------------------
# Small helpers (generation-aware budgets / tiling)
# ----------------------------------------------------------------------------
def _round_up(x, m):
    return ((int(x) + m - 1) // m) * m


def _vmem_capacity_bytes():
    try:
        return int(pltpu.get_tpu_info().vmem_capacity_bytes)
    except Exception:
        return 128 << 20


def _vmem_limit_bytes(block_resident_bytes):
    """Budget = 2x (double-buffered) block bytes + headroom, <= 75% of physical VMEM."""
    cap = _vmem_capacity_bytes()
    hi = int(cap * 0.75)
    return int(min(max(2 * int(block_resident_bytes) + (8 << 20), 32 << 20), hi))


def _default_matmul_tiles():
    # v7x (64 MiB VMEM): keep tiles modest; v5e/v6e (128 MiB): go bigger.
    if _vmem_capacity_bytes() <= (64 << 20):
        return 256, 512
    return 512, 512


def _tensorcores_per_chip():
    try:
        info = pltpu.get_tpu_info()
        for name in ("tensorcores_per_chip", "num_cores", "core_count"):
            n = getattr(info, name, None)
            if n:
                return int(n)
    except Exception:
        pass
    try:
        return max(1, int(getattr(jax.devices()[0], "num_cores", 1)))
    except Exception:
        return 1


def _largest_divisor(n, cap):
    for d in range(min(n, cap), 0, -1):
        if n % d == 0:
            return d
    return 1


# ----------------------------------------------------------------------------
# Kernel 1: tiled matmul + bias (hoisted x @ W_ih + b_lstm).
# ----------------------------------------------------------------------------
def _matmul_bias_kernel(x_ref, w_ref, b_ref, o_ref):
    o_ref[...] = (jnp.dot(x_ref[...], w_ref[...],
                          preferred_element_type=jnp.float32)
                  + b_ref[...]).astype(o_ref.dtype)


def matmul_bias(x, w, b, *, tn=None, tv=None):
    """y = x @ w + b.  Tiled over rows/cols; non-divisible shapes pad+slice."""
    N, K = x.shape
    M = w.shape[1]
    d_tn, d_tv = _default_matmul_tiles()
    tn = min(tn or d_tn, _round_up(N, 8))
    tv = min(tv or d_tv, _round_up(M, 128))

    Np, Mp = _round_up(N, tn), _round_up(M, tv)
    if Np != N:
        x = jnp.pad(x, ((0, Np - N), (0, 0)))
    if Mp != M:
        w = jnp.pad(w, ((0, 0), (0, Mp - M)))
        b = jnp.pad(b, ((0, 0), (0, Mp - M)))

    blk_bytes = 4 * (tn * K + K * tv + tv + tn * tv)
    out = pl.pallas_call(
        _matmul_bias_kernel,
        out_shape=jax.ShapeDtypeStruct((Np, Mp), jnp.float32),
        grid=(Np // tn, Mp // tv),
        in_specs=[pl.BlockSpec((tn, K), lambda i, j: (i, 0)),
                  pl.BlockSpec((K, tv), lambda i, j: (0, j)),
                  pl.BlockSpec((1, tv), lambda i, j: (0, j))],
        out_specs=pl.BlockSpec((tn, tv), lambda i, j: (i, j)),
        compiler_params=pltpu.CompilerParams(
            dimension_semantics=("parallel", "parallel"),
            vmem_limit_bytes=_vmem_limit_bytes(blk_bytes)),
    )(x, w, b)
    return out[:N, :M]


# ----------------------------------------------------------------------------
# Kernel 2: recurrent LSTM cell only (attention/classifier un-fused).
#   grid = (nb, T//Tt); Tt steps unrolled per grid step; h/c state carried in
#   the hT/cT output blocks (constant index over the innermost arbitrary axis).
# ----------------------------------------------------------------------------
def _lstm_seq_kernel(residual, *refs):
    if residual:
        gx_ref, emb_ref, h0_ref, c0_ref, whh_ref, tgt_ref, hT_ref, cT_ref = refs
    else:
        gx_ref, h0_ref, c0_ref, whh_ref, tgt_ref, hT_ref, cT_ref = refs
        emb_ref = None

    tb = pl.program_id(1)
    H = hT_ref.shape[-1]
    Tt = gx_ref.shape[0]

    @pl.when(tb == 0)
    def _():
        hT_ref[...] = h0_ref[...]
        cT_ref[...] = c0_ref[...]

    h = hT_ref[...]                      # (Bb, H) carried state
    c = cT_ref[...]                      # (Bb, H)
    w_hh = whh_ref[...]                  # (H, 4H), resident

    for tt in range(Tt):                 # static unroll over the time block
        gates = gx_ref[tt] + jnp.dot(h, w_hh,
                                     preferred_element_type=jnp.float32)  # (Bb,4H)
        i_g = jax.nn.sigmoid(gates[:, 0:H])
        f_g = jax.nn.sigmoid(gates[:, H:2 * H])
        g_g = jnp.tanh(gates[:, 2 * H:3 * H])
        o_g = jax.nn.sigmoid(gates[:, 3 * H:4 * H])
        c = f_g * c + i_g * g_g
        h = o_g * jnp.tanh(c)
        out = h + emb_ref[tt] if residual else h          # attention target
        tgt_ref[tt] = out.astype(tgt_ref.dtype)

    hT_ref[...] = h
    cT_ref[...] = c


def lstm_seq(gates_x, embedded_tbe, h0, c0, w_hh, *, residual, tt_target=8):
    T, B, G = gates_x.shape
    H = h0.shape[-1]
    E = embedded_tbe.shape[-1] if residual else 0

    # Batch-half "parallel" axis only when the chip has >=2 TensorCores and the
    # halves stay sublane-aligned (Bb >= 8).  Pure overhead on v5e/v6e.
    nb = 2 if (_tensorcores_per_chip() >= 2 and B % 16 == 0) else 1
    Bb = B // nb

    Tt = _largest_divisor(T, tt_target)   # Tt timesteps per grid step
    Tblocks = T // Tt

    in_arrays = [gates_x]
    in_specs = [pl.BlockSpec((Tt, Bb, G), lambda b, t: (t, b, 0))]
    if residual:
        in_arrays.append(embedded_tbe)
        in_specs.append(pl.BlockSpec((Tt, Bb, E), lambda b, t: (t, b, 0)))
    in_arrays += [h0, c0, w_hh]
    in_specs += [pl.BlockSpec((Bb, H), lambda b, t: (b, 0)),
                 pl.BlockSpec((Bb, H), lambda b, t: (b, 0)),
                 pl.BlockSpec((H, 4 * H), lambda b, t: (0, 0))]

    out_specs = (pl.BlockSpec((Tt, Bb, H), lambda b, t: (t, b, 0)),
                 pl.BlockSpec((Bb, H), lambda b, t: (b, 0)),
                 pl.BlockSpec((Bb, H), lambda b, t: (b, 0)))

    blk_bytes = 4 * (Tt * Bb * G + (Tt * Bb * E if residual else 0)
                     + 4 * Bb * H + H * 4 * H + Tt * Bb * H)

    kernel = functools.partial(_lstm_seq_kernel, residual)
    tgt, hT, cT = pl.pallas_call(
        kernel,
        out_shape=(jax.ShapeDtypeStruct((T, B, H), jnp.float32),
                   jax.ShapeDtypeStruct((B, H), jnp.float32),
                   jax.ShapeDtypeStruct((B, H), jnp.float32)),
        grid=(nb, Tblocks),
        in_specs=in_specs,
        out_specs=out_specs,
        compiler_params=pltpu.CompilerParams(
            dimension_semantics=("parallel", "arbitrary"),
            vmem_limit_bytes=_vmem_limit_bytes(blk_bytes)),
    )(*in_arrays)
    return tgt, hT, cT


# ----------------------------------------------------------------------------
# Kernel 3: dot attention + classifier, fully parallel over (B, T).
#   score = target @ ctx^T ; log_softmax over S ; cv = logp @ ctx ; logits.
#   (log_softmax weights — matches the original module's semantics.)
# ----------------------------------------------------------------------------
def _attn_cls_kernel(tgt_ref, ctx_ref, wcls_ref, bcls_ref, logits_ref):
    tgt = tgt_ref[...]                                   # (Bb, T, H)
    ctx = ctx_ref[...]                                   # (Bb, S, H)
    score = jnp.einsum('bth,bsh->bts', tgt, ctx,
                       preferred_element_type=jnp.float32)        # (Bb, T, S)
    m = jnp.max(score, axis=-1, keepdims=True)
    lse = jnp.log(jnp.sum(jnp.exp(score - m), axis=-1, keepdims=True)) + m
    logp = score - lse                                   # log_softmax over S
    cv = jnp.einsum('bts,bsh->bth', logp, ctx,
                    preferred_element_type=jnp.float32)            # (Bb, T, H)
    logits = jnp.einsum('bth,hv->btv', cv, wcls_ref[...],
                        preferred_element_type=jnp.float32) + bcls_ref[...]
    logits_ref[...] = logits.astype(logits_ref.dtype)


def attention_classifier(target_bth, context, w_cls, b_cls):
    B, T, H = target_bth.shape
    S = context.shape[1]
    V = w_cls.shape[1]

    # Lane-dense logits: pad V to a multiple of 128, slice back at the end.
    Vp = _round_up(V, 128)
    if Vp != V:
        w_cls = jnp.pad(w_cls, ((0, 0), (0, Vp - V)))
        b_cls = jnp.pad(b_cls, ((0, 0), (0, Vp - V)))

    def blk_bytes(bb):
        return 4 * (bb * T * H + bb * S * H + H * Vp + Vp
                    + bb * T * Vp + 3 * bb * T * S + bb * T * H)

    Bb = 1
    for d in range(B, 0, -1):
        if B % d == 0 and blk_bytes(d) <= (8 << 20):
            Bb = d
            break

    logits_p = pl.pallas_call(
        _attn_cls_kernel,
        out_shape=jax.ShapeDtypeStruct((B, T, Vp), jnp.float32),
        grid=(B // Bb,),
        in_specs=[pl.BlockSpec((Bb, T, H), lambda i: (i, 0, 0)),
                  pl.BlockSpec((Bb, S, H), lambda i: (i, 0, 0)),
                  pl.BlockSpec((H, Vp), lambda i: (0, 0)),
                  pl.BlockSpec((1, Vp), lambda i: (0, 0))],
        out_specs=pl.BlockSpec((Bb, T, Vp), lambda i: (i, 0, 0)),
        compiler_params=pltpu.CompilerParams(
            dimension_semantics=("parallel",),
            vmem_limit_bytes=_vmem_limit_bytes(blk_bytes(Bb))),
    )(target_bth, context, w_cls, b_cls)
    return logits_p[..., :V]


# ----------------------------------------------------------------------------
# Full AttentionDecoder forward (get_attention=False path)
# ----------------------------------------------------------------------------
def attention_decoder_forward(context, dec_input, hidden, params, *, residual):
    emb_table = params["embedding"]
    B, T = dec_input.shape
    E = emb_table.shape[1]
    H = params["w_hh"].shape[0]

    embedded = emb_table[dec_input]                       # (B, T, E) gather (glue)
    embedded_tbe = jnp.transpose(embedded, (1, 0, 2))     # (T, B, E)  (E-wide, cheap)

    # Hoisted input projection + LSTM bias, computed directly in time-major
    # layout (no 4H-wide transpose afterwards).
    gates_x = matmul_bias(embedded_tbe.reshape(T * B, E),
                          params["w_ih"], params["b_lstm"])        # (T*B, 4H)
    gates_x = gates_x.reshape(T, B, 4 * H)                          # (T, B, 4H)

    h0, c0 = hidden
    # Recurrence only: emits the attention-target sequence + final state.
    target_tbh, hT, cT = lstm_seq(
        gates_x, embedded_tbe if residual else None, h0, c0,
        params["w_hh"], residual=residual)

    # Attention + classifier: fully parallel over (B, T).
    target_bth = jnp.transpose(target_tbh, (1, 0, 2))               # (B, T, H)
    logits = attention_classifier(target_bth, context,
                                  params["w_cls"], params["b_cls"])  # (B, T, V)
    return logits, (hT, cT)


# ----------------------------------------------------------------------------
# Pure-JAX reference (for correctness check)
# ----------------------------------------------------------------------------
def reference_forward(context, dec_input, hidden, params, *, residual):
    emb = params["embedding"][dec_input]                  # (B, T, E)
    H = params["w_hh"].shape[0]
    w_ih, w_hh, b = params["w_ih"], params["w_hh"], params["b_lstm"][0]

    def step(carry, x):
        h, c = carry
        gates = x @ w_ih + h @ w_hh + b
        i = jax.nn.sigmoid(gates[:, :H])
        f = jax.nn.sigmoid(gates[:, H:2 * H])
        g = jnp.tanh(gates[:, 2 * H:3 * H])
        o = jax.nn.sigmoid(gates[:, 3 * H:])
        c_new = f * c + i * g
        h_new = o * jnp.tanh(c_new)
        out = h_new + x if residual else h_new
        score = jnp.einsum('bsh,bh->bs', context, out)
        logp = jax.nn.log_softmax(score, axis=-1)
        cv = jnp.einsum('bsh,bs->bh', context, logp)
        return (h_new, c_new), cv

    (hT, cT), cvs = jax.lax.scan(step, hidden, jnp.transpose(emb, (1, 0, 2)))
    outputs = jnp.transpose(cvs, (1, 0, 2))               # (B, T, H)
    logits = outputs @ params["w_cls"] + params["b_cls"][0]
    return logits, (hT, cT)


# ----------------------------------------------------------------------------
if __name__ == "__main__":
    # Small shapes consistent with the module
    B, S, T = 2, 8, 5          # batch, encoder seq len, decoder seq len
    V = 50                     # embedding_size (vocab)
    E = 32                     # embedding_dim
    H = 32                     # rnn_dim
    PAD_ID = 0
    RESIDUAL = (E == H)        # residual branch applies only when sizes match

    key = jax.random.PRNGKey(0)
    ks = jax.random.split(key, 10)

    emb_table = 0.1 * jax.random.normal(ks[0], (V, E), jnp.float32)
    emb_table = emb_table.at[PAD_ID].set(0.0)             # padding_idx row = 0

    params = {
        "embedding": emb_table,
        # LSTMCell weights stored transposed: (E,4H), (H,4H); bias = b_ih + b_hh
        "w_ih": 0.1 * jax.random.normal(ks[1], (E, 4 * H), jnp.float32),
        "w_hh": 0.1 * jax.random.normal(ks[2], (H, 4 * H), jnp.float32),
        "b_lstm": 0.1 * jax.random.normal(ks[3], (1, 4 * H), jnp.float32),
        # classifier Linear(H, V) stored as (H, V) + (1, V)
        "w_cls": 0.1 * jax.random.normal(ks[4], (H, V), jnp.float32),
        "b_cls": 0.1 * jax.random.normal(ks[5], (1, V), jnp.float32),
    }

    context = jax.random.normal(ks[6], (B, S, H), jnp.float32)
    dec_input = jax.random.randint(ks[7], (B, T), 0, V, dtype=jnp.int32)
    hidden = (jnp.zeros((B, H), jnp.float32), jnp.zeros((B, H), jnp.float32))

    logits, (hT, cT) = attention_decoder_forward(
        context, dec_input, hidden, params, residual=RESIDUAL)
    jax.block_until_ready((logits, hT, cT))

    ref_logits, (ref_hT, ref_cT) = reference_forward(
        context, dec_input, hidden, params, residual=RESIDUAL)

    assert logits.shape == (B, T, V)
    assert jnp.allclose(logits, ref_logits, atol=1e-4, rtol=1e-4)
    assert jnp.allclose(hT, ref_hT, atol=1e-5, rtol=1e-5)
    assert jnp.allclose(cT, ref_cT, atol=1e-5, rtol=1e-5)

    print("KERNEL_OK")
</pallas_src>

<mosaic_0001>
module attributes {stable_mosaic.version = 11 : i64} {
  func.func @_matmul_bias_kernel(%arg0: i32, %arg1: i32, %arg2: memref<16x32xf32, #tpu.memory_space<vmem>>, %arg3: memref<32x128xf32, #tpu.memory_space<vmem>>, %arg4: memref<1x128xf32, #tpu.memory_space<vmem>>, %arg5: memref<16x128xf32, #tpu.memory_space<vmem>>) attributes {dimension_semantics = [#tpu.dimension_semantics<parallel>, #tpu.dimension_semantics<parallel>], iteration_bounds = array<i64: 1, 1>, scalar_prefetch = 0 : i64, scratch_operands = 0 : i64, tpu.core_type = #tpu.core_type<tc>, window_params = [{transform_indices = @transform_0, window_bounds = array<i64: 16, 32>}, {transform_indices = @transform_1, window_bounds = array<i64: 32, 128>}, {transform_indices = @transform_2, window_bounds = array<i64: 1, 128>}, {transform_indices = @transform_3, window_bounds = array<i64: 16, 128>}]} {
    %c0 = arith.constant 0 : index
    %c0_0 = arith.constant 0 : index
    %0 = vector.load %arg2[%c0, %c0_0] : memref<16x32xf32, #tpu.memory_space<vmem>>, vector<16x32xf32>
    %c0_1 = arith.constant 0 : index
    %c0_2 = arith.constant 0 : index
    %1 = vector.load %arg3[%c0_1, %c0_2] : memref<32x128xf32, #tpu.memory_space<vmem>>, vector<32x128xf32>
    %cst = arith.constant dense<0.000000e+00> : vector<16x128xf32>
    %2 = tpu.matmul %0, %1, %cst {dimension_numbers = #tpu.dot_dimension_numbers<[1], [0], [0], [1], [0, 0, 1, 1], [], []>} : vector<16x32xf32>, vector<32x128xf32>, vector<16x128xf32> -> vector<16x128xf32>
    %c0_3 = arith.constant 0 : index
    %c0_4 = arith.constant 0 : index
    %3 = vector.load %arg4[%c0_3, %c0_4] : memref<1x128xf32, #tpu.memory_space<vmem>>, vector<1x128xf32>
    %4 = vector.broadcast %3 : vector<1x128xf32> to vector<16x128xf32>
    %5 = arith.addf %2, %4 : vector<16x128xf32>
    %c0_5 = arith.constant 0 : index
    %c0_6 = arith.constant 0 : index
    %6 = vector.load %arg5[%c0_5, %c0_6] : memref<16x128xf32, #tpu.memory_space<vmem>>, vector<16x128xf32>
    tpu.vector_store %arg5[%c0_5, %c0_6], %5 {strides = array<i32>} : memref<16x128xf32, #tpu.memory_space<vmem>>, vector<16x128xf32>,
    return
  }
  func.func @transform_0(%arg0: i32, %arg1: i32) -> (i32, i32) {
    %c0_i32 = arith.constant 0 : i32
    %c0_i32_0 = arith.constant 0 : i32
    return %arg0, %c0_i32 : i32, i32
  }
  func.func @transform_1(%arg0: i32, %arg1: i32) -> (i32, i32) {
    %c0_i32 = arith.constant 0 : i32
    %c0_i32_0 = arith.constant 0 : i32
    return %c0_i32, %arg1 : i32, i32
  }
  func.func @transform_2(%arg0: i32, %arg1: i32) -> (i32, i32) {
    %c0_i32 = arith.constant 0 : i32
    %c0_i32_0 = arith.constant 0 : i32
    return %c0_i32, %arg1 : i32, i32
  }
  func.func @transform_3(%arg0: i32, %arg1: i32) -> (i32, i32) {
    %c0_i32 = arith.constant 0 : i32
    return %arg0, %arg1 : i32, i32
  }
}

</mosaic_0001>

<llo_original>
// kernel: tpu_custom_call.1
$region0: #{tpu_custom_call.1}
  #allocation0 [shape = 'u32[]', space=smem, size = 0x4, offset = 0x4, fixed_abs, tag = 'smem constant byte address 0x4 - core index']
  #allocation1 [shape = 'u32[72,128]{1,0:T(1,128)}', space=vmem, size = 0x9000, scoped, tag = 'internal scratch']
  %s0 = inlined_call_operand.hbm [shape: f32[16,32], index: 0, kind: input, shape index: {}]
  %s1 = inlined_call_operand.hbm [shape: f32[32,128], index: 1, kind: input, shape index: {}]
  %s2 = inlined_call_operand.vmem [shape: f32[1,128], index: 2, kind: input, shape index: {}]
  %s3 = inlined_call_operand.hbm [shape: f32[16,128], index: 3, kind: output, shape index: {}]
  %s4 = sld [smem:[#allocation0]]
  $region30: #{tpu_custom_call.1} parent=0
    _
  %s6 = ssub.s32 1, %s4
  %s7 = scalar_select 0, %s6, %s4
  $region1: #{tpu_custom_call.1} parent=0
    #allocation2 [shape = 'u8[8192]{0}', space=vmem, size = 0x2000, scoped, tag = 'input window, operand 0, single buffered']
    #allocation3 [shape = 's32[1]{0}', space=sflag, size = 0x4, scoped, tag = 'scoped memory for tpu_custom_call.1']
    #allocation4 [shape = 's32[1]{0}', space=sflag, size = 0x4, scoped, tag = 'scoped memory for tpu_custom_call.1']
    #allocation5 [shape = 'u8[16384]{0}', space=vmem, size = 0x4000, scoped, tag = 'input window, operand 1, single buffered']
    #allocation6 [shape = 's32[1]{0}', space=sflag, size = 0x4, scoped, tag = 'scoped memory for tpu_custom_call.1']
    #allocation7 [shape = 'u8[8192]{0}', space=vmem, size = 0x2000, scoped, tag = 'output window, operand 0, single buffered']
    %8 = vsyncpa [#allocation3], 0
    %9 = vsyncpa [#allocation6], 0
    %10 = vsyncpa [#allocation4], 0
    // Predicated region
    $region2: #{tpu_custom_call.1} parent=1 // pred_check
      _
    $region3: #{tpu_custom_call.1} parent=1 // pred_check_branch
      %12 = sbr.rel (0) target = $region5
    $region4: #{tpu_custom_call.1} parent=1 // pred_region
      %14 = vsyncadd [#allocation3], 0
      %s15 = sshll.u32 %s0, 4
      %s16 = int_to_ptr.hbm [resolvable:$true] %s15
      %s17 = sshll.u32 [#allocation2], 4
      %s18 = int_to_ptr.vmem [resolvable:$true] %s17
      %23 = dma.hbm_to_vmem [thread:$0]  %s16, 256, %s18, [#allocation3], 128, 128, 8
    $region5: #{tpu_custom_call.1} parent=1 // pred_fallthru
      _
    // Predicated region
    $region6: #{tpu_custom_call.1} parent=1 // pred_check
      _
    $region7: #{tpu_custom_call.1} parent=1 // pred_check_branch
      %25 = sbr.rel (0) target = $region9
    $region8: #{tpu_custom_call.1} parent=1 // pred_region
      %27 = vsyncadd [#allocation6], 0
      %s28 = sshll.u32 %s1, 4
      %s29 = int_to_ptr.hbm [resolvable:$true] %s28
      %s30 = sshll.u32 [#allocation5], 4
      %s31 = int_to_ptr.vmem [resolvable:$true] %s30
      %36 = dma.hbm_to_vmem [thread:$0]  %s29, 512, %s31, [#allocation6], 128, 128, 8
    $region9: #{tpu_custom_call.1} parent=1 // pred_fallthru
      _
    // Predicated region
    $region10: #{tpu_custom_call.1} parent=1 // pred_check
      _
    $region11: #{tpu_custom_call.1} parent=1 // pred_check_branch
      %38 = sbr.rel (0) target = $region13
    $region12: #{tpu_custom_call.1} parent=1 // pred_region
      _
    $region13: #{tpu_custom_call.1} parent=1 // pred_fallthru
      _
    // Predicated region
    $region14: #{tpu_custom_call.1} parent=1 // pred_check
      _
    $region15: #{tpu_custom_call.1} parent=1 // pred_check_branch
      %40 = sbr.rel (0) target = $region17
    $region16: #{tpu_custom_call.1} parent=1 // pred_region
      %42 = dma.done [#allocation3], 256
    $region17: #{tpu_custom_call.1} parent=1 // pred_fallthru
      _
    // Predicated region
    $region18: #{tpu_custom_call.1} parent=1 // pred_check
      _
    $region19: #{tpu_custom_call.1} parent=1 // pred_check_branch
      %44 = sbr.rel (0) target = $region21
    $region20: #{tpu_custom_call.1} parent=1 // pred_region
      %46 = dma.done [#allocation6], 512
    $region21: #{tpu_custom_call.1} parent=1 // pred_fallthru
      _
    %v47 = vld [vmem:[#allocation2] sm:$0xff]
    %v48 = vld [vmem:[#allocation2 + $0x8] sm:$0xff]
    %v49 = vld [vmem:[#allocation5] sm:$0xff]
    %v50 = vld [vmem:[#allocation5 + $0x8] sm:$0xff]
    %v51 = vld [vmem:[#allocation5 + $0x10] sm:$0xff]
    %v52 = vld [vmem:[#allocation5 + $0x18] sm:$0xff]
    %v53 = vld [vmem:[%s2] sm:$0x1]
    %v55 = vperm.slane %v53, 0
    %vm57 = vcmask 261120
    %v59 = vsel %vm57, %v47, 0
    %v62 = vsel %vm57, %v48, 0
    %64 = vmatpush.msra.mxu0 0.0
    %65 = vmatpush.msra.mxu0 0.0
    %66 = vmatpush.msra.mxu0 0.0
    %67 = vmatpush.msra.mxu0 0.0
    %68 = vmatpush.msra.mxu0 0.0
    %69 = vmatpush.msra.mxu0 0.0
    %70 = vmatpush.msra.mxu0 0.0
    %71 = vmatpush.msra.mxu0 0.0
    %72 = vmatpush.msra.mxu0 0.0
    %73 = vmatpush.msra.mxu0 0.0
    %74 = vmatpush.msra.mxu0 0.0
    %75 = vmatpush.msra.mxu0 0.0
    %76 = vmatpush.msra.mxu0 %v52
    %77 = vmatpush.msra.mxu0 %v51
    %78 = vmatpush.msra.mxu0 %v50
    %79 = vmatpush.msra.mxu0 %v49
    %80 = vmatmul.f32.gmra.mxu0 %v59
    %v81 = vpop.f32.mrf.mxu0
    %v82 = vadd.f32 %v55, %v81
    %83 = vmatmul.f32.gmra.mxu0 %v62
    %v84 = vpop.f32.mrf.mxu0
    %v85 = vadd.f32 %v55, %v84
    %86 = vdwg.mxu0
    %87 = vst [vmem:[#allocation7] sm:$0xff] %v82
    %88 = vst [vmem:[#allocation7 + $0x8] sm:$0xff] %v85
    // Predicated region
    $region22: #{tpu_custom_call.1} parent=1 // pred_check
      _
    $region23: #{tpu_custom_call.1} parent=1 // pred_check_branch
      %90 = sbr.rel (0) target = $region25
    $region24: #{tpu_custom_call.1} parent=1 // pred_region
      %92 = vsyncadd [#allocation4], 0
      %s93 = sshll.u32 [#allocation7], 4
      %s94 = int_to_ptr.vmem [resolvable:$true] %s93
      %s95 = sshll.u32 %s3, 4
      %s96 = int_to_ptr.hbm [resolvable:$true] %s95
      %101 = dma.vmem_to_hbm [thread:$0]  %s94, 256, %s96, [#allocation4], 128, 128, 8
    $region25: #{tpu_custom_call.1} parent=1 // pred_fallthru
      _
    // Predicated region
    $region26: #{tpu_custom_call.1} parent=1 // pred_check
      _
    $region27: #{tpu_custom_call.1} parent=1 // pred_check_branch
      %103 = sbr.rel (0) target = $region29
    $region28: #{tpu_custom_call.1} parent=1 // pred_region
      %105 = dma.done [#allocation4], 256
    $region29: #{tpu_custom_call.1} parent=1 // pred_fallthru
      _
    %106 = vsyncpa [#allocation3], 1
    %107 = vsyncpa [#allocation6], 1
    %108 = vsyncpa [#allocation4], 1

</llo_original>
